<compile_context>
chip_gen: v7x
topology: tpu7x:2x2x1
jax: 0.10.0
libtpu: 0.0.40
codegen_flags: <defaults>
</compile_context>

<pallas_src>
import functools

import jax
import jax.numpy as jnp
from jax.experimental import pallas as pl
from jax.experimental.pallas import tpu as pltpu


def _lstm_fc_kernel(x_ref, w_ih_ref, w_hh_ref, b_ref, w_fc_ref, b_fc_ref,
                    out_ref, *, hidden_dim, seq_len, batch):
    H = hidden_dim
    G = 4 * H
    T = seq_len
    B = batch
    mxu_dtype = w_hh_ref.dtype

    # ---- Hoisted input projection for ALL timesteps (off the recurrence chain):
    # one (T*B, F) @ (F, 4H) MXU matmul, combined (and pre-scaled) bias added once.
    xw = jnp.dot(x_ref[...], w_ih_ref[...],
                 preferred_element_type=jnp.float32) + b_ref[...]    # (T*B, 4H) f32

    w_hh = w_hh_ref[...]                       # (4H, 4H); rows >= H are zero.

    # Lane constants for the single-tanh gate evaluation (hoisted out of the loop).
    # Packed gate order is (f, i, o, g):  gates = tanh(pre) * mul_c + add_c
    #   = [sigma(z_f), sigma(z_i), sigma(z_o), tanh(z_g)]
    # (the 0.5 input scale of sigma(x) = 0.5*tanh(0.5*x) + 0.5 was folded into the
    #  packed f/i/o weight columns and bias at init time).
    lane = jax.lax.broadcasted_iota(jnp.int32, (1, G), 1)
    is_g = lane >= 3 * H
    mul_c = jnp.where(is_g, 1.0, 0.5).astype(jnp.float32)
    add_c = jnp.where(is_g, 0.0, 0.5).astype(jnp.float32)

    # Lane-packed state: only lanes [0, H) are meaningful; garbage lanes stay bounded
    # and are absorbed by the zero rows of w_hh / w_fc.
    h = jnp.zeros((B, G), mxu_dtype)
    c = jnp.zeros((B, G), jnp.float32)

    # ---- Sequential recurrence, fully unrolled (T small & static -> all-static slices).
    for t in range(T):
        pre = xw[t * B:(t + 1) * B, :] + jnp.dot(
            h, w_hh, preferred_element_type=jnp.float32)          # (B, 4H) f32
        th = jnp.tanh(pre)                                        # 1 EUP pass (all gates)
        gates = th * mul_c + add_c                                # [sf, si, so, tg]
        g64 = pltpu.roll(gates, 2 * H, 1)                         # [so, tg, sf, si] (XLU)
        prod = gates * g64                                        # blocks 1 & 3 = si*tg
        ig = pltpu.roll(prod, H, 1)                               # block 0 = si*tg (XLU)
        c = gates * c + ig                                        # block 0: sf*c + si*tg
        h = (g64 * jnp.tanh(c)).astype(mxu_dtype)                 # block 0: so*tanh(c)

    # ---- FC head on the last hidden state; lane-dense padded output store.
    out_ref[...] = (jnp.dot(h, w_fc_ref[...], preferred_element_type=jnp.float32)
                    + b_fc_ref[...]).astype(out_ref.dtype)


@functools.partial(jax.jit, static_argnums=(2, 3))
def lstm_model_forward(x, params, hidden_dim, num_classes):
    """x: (B, T, F) float32.  Returns (B, num_classes) float32."""
    B, T, F_ = x.shape
    H = hidden_dim
    G = 4 * H
    CP = params["w_fc"].shape[-1]              # num_classes padded to 128 lanes
    mxu_dtype = params["w_ih"].dtype

    # Wrapper-side layout prep (free in XLA): time-major 2-D x so the kernel's per-step
    # slice is a static contiguous sublane block, pre-cast to the MXU dtype so the cast
    # and half-size DMA (bf16 path) are outside the kernel.
    x2d = jnp.transpose(x, (1, 0, 2)).reshape(T * B, F_).astype(mxu_dtype)

    kernel = functools.partial(_lstm_fc_kernel, hidden_dim=H, seq_len=T, batch=B)

    flops = 2 * T * B * F_ * G + 2 * T * B * G * G + 2 * B * G * CP
    transcendentals = 2 * T * B * G            # two tanh passes per timestep
    bytes_accessed = (T * B * F_ * x2d.dtype.itemsize
                      + sum(int(params[k].size) * params[k].dtype.itemsize
                            for k in params)
                      + B * CP * 4)

    out_padded = pl.pallas_call(
        kernel,
        out_shape=jax.ShapeDtypeStruct((B, CP), jnp.float32),
        in_specs=[pl.BlockSpec(memory_space=pltpu.MemorySpace.VMEM)] * 6,
        out_specs=pl.BlockSpec(memory_space=pltpu.MemorySpace.VMEM),
        cost_estimate=pl.CostEstimate(flops=flops,
                                      transcendentals=transcendentals,
                                      bytes_accessed=bytes_accessed),
    )(x2d, params["w_ih"], params["w_hh"], params["b"],
      params["w_fc"], params["b_fc"])
    return out_padded[:, :num_classes]


def init_params(key, feat, hidden_dim, num_classes, mxu_dtype=jnp.float32):
    """Deterministic synthetic init.

    Returns (packed, pt):
      packed: kernel layout -- column gate order (f, i, o, g), f/i/o columns and bias
              pre-scaled by 0.5 (tanh-form sigmoid); W_ih (F, 4H); W_hh row-padded to
              (4H, 4H); combined bias (1, 4H) f32; W_fc row-padded to (4H, Cpad) and
              b_fc (1, Cpad) with Cpad a 128-multiple.
      pt:     PyTorch-shaped f32 params (gate order i, f, g, o) for the reference.
    """
    H = hidden_dim
    G = 4 * H
    k1, k2, k3, k4, k5, k6 = jax.random.split(key, 6)
    scale = 0.1
    w_ih_pt = scale * jax.random.normal(k1, (G, feat), jnp.float32)
    w_hh_pt = scale * jax.random.normal(k2, (G, H), jnp.float32)
    b_ih = scale * jax.random.normal(k3, (G,), jnp.float32)
    b_hh = scale * jax.random.normal(k4, (G,), jnp.float32)
    w_fc_pt = scale * jax.random.normal(k5, (num_classes, H), jnp.float32)
    b_fc = scale * jax.random.normal(k6, (num_classes,), jnp.float32)

    order = (1, 0, 3, 2)             # PyTorch (i, f, g, o) -> packed (f, i, o, g)
    gate_scale = (0.5, 0.5, 0.5, 1.0)  # fold sigma(x)=0.5*tanh(0.5x)+0.5 input scale

    def pack(w_pt, in_dim):
        blocks = w_pt.reshape(4, H, in_dim)               # gate-major PyTorch blocks
        cols = [(s * blocks[g]).T for g, s in zip(order, gate_scale)]
        return jnp.concatenate(cols, axis=1)              # (in_dim, 4H) f32

    w_ih = pack(w_ih_pt, feat).astype(mxu_dtype)          # (F, 4H)
    w_hh_rows = pack(w_hh_pt, H)                          # (H, 4H)
    # Row-pad to (4H, 4H): packed h state carries garbage in lanes [H, 4H), which must
    # hit zero rows (K = 4H costs the same single MXU pass as K = H).
    w_hh = jnp.zeros((G, G), jnp.float32).at[:H, :].set(w_hh_rows).astype(mxu_dtype)

    b_sum = (b_ih + b_hh).reshape(4, H)
    b = jnp.concatenate([s * b_sum[g] for g, s in zip(order, gate_scale)]
                        ).reshape(1, G)                   # f32

    cp = ((num_classes + 127) // 128) * 128               # lane-dense output width
    w_fc = jnp.zeros((G, cp), jnp.float32).at[:H, :num_classes].set(
        w_fc_pt.T).astype(mxu_dtype)
    b_fc_p = jnp.zeros((1, cp), jnp.float32).at[:, :num_classes].set(b_fc)

    packed = dict(w_ih=w_ih, w_hh=w_hh, b=b, w_fc=w_fc, b_fc=b_fc_p)
    pt = dict(w_ih=w_ih_pt, w_hh=w_hh_pt, b_ih=b_ih, b_hh=b_hh,
              w_fc=w_fc_pt, b_fc=b_fc)
    return packed, pt


def reference_forward(x, pt, hidden_dim):
    """Pure-JAX reference matching torch.nn.LSTM (batch_first) + Linear."""
    B, T, F = x.shape
    H = hidden_dim

    def step(carry, x_t):
        h, c = carry
        gates = x_t @ pt["w_ih"].T + pt["b_ih"] + h @ pt["w_hh"].T + pt["b_hh"]
        i, f, g, o = jnp.split(gates, 4, axis=-1)
        i = jax.nn.sigmoid(i); f = jax.nn.sigmoid(f)
        g = jnp.tanh(g); o = jax.nn.sigmoid(o)
        c = f * c + i * g
        h = o * jnp.tanh(c)
        return (h, c), h

    h0 = jnp.zeros((B, H), jnp.float32)
    c0 = jnp.zeros((B, H), jnp.float32)
    (h_last, _), _ = jax.lax.scan(step, (h0, c0), jnp.transpose(x, (1, 0, 2)))
    return h_last @ pt["w_fc"].T + pt["b_fc"]


if __name__ == "__main__":
    B, T, F, H, C = 4, 8, 16, 32, 6        # 4H == 128 -> lane-dense gate packing

    key = jax.random.PRNGKey(0)
    kx, kp = jax.random.split(key)
    x = jax.random.normal(kx, (B, T, F), jnp.float32)

    params_f32, pt_params = init_params(kp, F, H, C, mxu_dtype=jnp.float32)
    ref = jax.block_until_ready(reference_forward(x, pt_params, H))

    # f32 MXU operands (matches PyTorch f32 semantics; recommended path on v5e).
    out_f32 = jax.block_until_ready(lstm_model_forward(x, params_f32, H, C))
    assert out_f32.shape == (B, C)
    assert jnp.allclose(out_f32, ref, atol=1e-4, rtol=1e-4), (
        f"f32 max abs err {jnp.max(jnp.abs(out_f32 - ref))}")

    # bf16 MXU operands + bf16 h carry (v6e/v7x fast path); gate math and c stay f32.
    params_bf16, _ = init_params(kp, F, H, C, mxu_dtype=jnp.bfloat16)
    out_bf16 = jax.block_until_ready(lstm_model_forward(x, params_bf16, H, C))
    assert out_bf16.shape == (B, C)
    assert jnp.allclose(out_bf16, ref, atol=5e-2, rtol=5e-2), (
        f"bf16 max abs err {jnp.max(jnp.abs(out_bf16 - ref))}")

    print("KERNEL_OK")
</pallas_src>

<mosaic_0001>
module attributes {stable_mosaic.version = 11 : i64} {
  func.func @_lstm_fc_kernel(%arg0: memref<32x16xf32, #tpu.memory_space<vmem>>, %arg1: memref<16x128xf32, #tpu.memory_space<vmem>>, %arg2: memref<128x128xf32, #tpu.memory_space<vmem>>, %arg3: memref<1x128xf32, #tpu.memory_space<vmem>>, %arg4: memref<128x128xf32, #tpu.memory_space<vmem>>, %arg5: memref<1x128xf32, #tpu.memory_space<vmem>>, %arg6: memref<4x128xf32, #tpu.memory_space<vmem>>) attributes {dimension_semantics = [], scalar_prefetch = 0 : i64, scratch_operands = 0 : i64, tpu.core_type = #tpu.core_type<tc>} {
    %c0 = arith.constant 0 : index
    %c0_0 = arith.constant 0 : index
    %0 = vector.load %arg0[%c0, %c0_0] : memref<32x16xf32, #tpu.memory_space<vmem>>, vector<32x16xf32>
    %c0_1 = arith.constant 0 : index
    %c0_2 = arith.constant 0 : index
    %1 = vector.load %arg1[%c0_1, %c0_2] : memref<16x128xf32, #tpu.memory_space<vmem>>, vector<16x128xf32>
    %cst = arith.constant dense<0.000000e+00> : vector<32x128xf32>
    %2 = tpu.matmul %0, %1, %cst {dimension_numbers = #tpu.dot_dimension_numbers<[1], [0], [0], [1], [0, 0, 1, 1], [], []>} : vector<32x16xf32>, vector<16x128xf32>, vector<32x128xf32> -> vector<32x128xf32>
    %c0_3 = arith.constant 0 : index
    %c0_4 = arith.constant 0 : index
    %3 = vector.load %arg3[%c0_3, %c0_4] : memref<1x128xf32, #tpu.memory_space<vmem>>, vector<1x128xf32>
    %4 = vector.broadcast %3 : vector<1x128xf32> to vector<32x128xf32>
    %5 = arith.addf %2, %4 : vector<32x128xf32>
    %c0_5 = arith.constant 0 : index
    %c0_6 = arith.constant 0 : index
    %6 = vector.load %arg2[%c0_5, %c0_6] : memref<128x128xf32, #tpu.memory_space<vmem>>, vector<128x128xf32>
    %7 = tpu.iota {dimensions = array<i32: 1>} : vector<1x128xi32>
    %c96_i32 = arith.constant 96 : i32
    %8 = vector.broadcast %c96_i32 : i32 to vector<1x128xi32>
    %9 = arith.cmpi sge, %7, %8 : vector<1x128xi32>
    %cst_7 = arith.constant 1.000000e+00 : f32
    %cst_8 = arith.constant 5.000000e-01 : f32
    %10 = vector.broadcast %cst_7 : f32 to vector<1x128xf32>
    %11 = vector.broadcast %cst_8 : f32 to vector<1x128xf32>
    %12 = arith.select %9, %10, %11 : vector<1x128xi1>, vector<1x128xf32>
    %cst_9 = arith.constant 0.000000e+00 : f32
    %cst_10 = arith.constant 5.000000e-01 : f32
    %13 = vector.broadcast %cst_9 : f32 to vector<1x128xf32>
    %14 = vector.broadcast %cst_10 : f32 to vector<1x128xf32>
    %15 = arith.select %9, %13, %14 : vector<1x128xi1>, vector<1x128xf32>
    %cst_11 = arith.constant 0.000000e+00 : f32
    %16 = vector.broadcast %cst_11 : f32 to vector<4x128xf32>
    %cst_12 = arith.constant 0.000000e+00 : f32
    %17 = vector.broadcast %cst_12 : f32 to vector<4x128xf32>
    %18 = vector.extract_strided_slice %5 {offsets = [0, 0], sizes = [4, 128], strides = [1, 1]} : vector<32x128xf32> to vector<4x128xf32>
    %cst_13 = arith.constant dense<0.000000e+00> : vector<4x128xf32>
    %19 = tpu.matmul %16, %6, %cst_13 {dimension_numbers = #tpu.dot_dimension_numbers<[1], [0], [0], [1], [0, 0, 1, 1], [], []>} : vector<4x128xf32>, vector<128x128xf32>, vector<4x128xf32> -> vector<4x128xf32>
    %20 = arith.addf %18, %19 : vector<4x128xf32>
    %21 = math.tanh %20 : vector<4x128xf32>
    %22 = vector.broadcast %12 : vector<1x128xf32> to vector<4x128xf32>
    %23 = arith.mulf %21, %22 : vector<4x128xf32>
    %24 = vector.broadcast %15 : vector<1x128xf32> to vector<4x128xf32>
    %25 = arith.addf %23, %24 : vector<4x128xf32>
    %c64_i32 = arith.constant 64 : i32
    %26 = tpu.dynamic_rotate %25 by %c64_i32 dim 1 : vector<4x128xf32>, i32 -> vector<4x128xf32>
    %27 = arith.mulf %25, %26 : vector<4x128xf32>
    %c32_i32 = arith.constant 32 : i32
    %28 = tpu.dynamic_rotate %27 by %c32_i32 dim 1 : vector<4x128xf32>, i32 -> vector<4x128xf32>
    %29 = arith.mulf %25, %17 : vector<4x128xf32>
    %30 = arith.addf %29, %28 : vector<4x128xf32>
    %31 = math.tanh %30 : vector<4x128xf32>
    %32 = arith.mulf %26, %31 : vector<4x128xf32>
    %33 = vector.extract_strided_slice %5 {offsets = [4, 0], sizes = [4, 128], strides = [1, 1]} : vector<32x128xf32> to vector<4x128xf32>
    %cst_14 = arith.constant dense<0.000000e+00> : vector<4x128xf32>
    %34 = tpu.matmul %32, %6, %cst_14 {dimension_numbers = #tpu.dot_dimension_numbers<[1], [0], [0], [1], [0, 0, 1, 1], [], []>} : vector<4x128xf32>, vector<128x128xf32>, vector<4x128xf32> -> vector<4x128xf32>
    %35 = arith.addf %33, %34 : vector<4x128xf32>
    %36 = math.tanh %35 : vector<4x128xf32>
    %37 = vector.broadcast %12 : vector<1x128xf32> to vector<4x128xf32>
    %38 = arith.mulf %36, %37 : vector<4x128xf32>
    %39 = vector.broadcast %15 : vector<1x128xf32> to vector<4x128xf32>
    %40 = arith.addf %38, %39 : vector<4x128xf32>
    %c64_i32_15 = arith.constant 64 : i32
    %41 = tpu.dynamic_rotate %40 by %c64_i32_15 dim 1 : vector<4x128xf32>, i32 -> vector<4x128xf32>
    %42 = arith.mulf %40, %41 : vector<4x128xf32>
    %c32_i32_16 = arith.constant 32 : i32
    %43 = tpu.dynamic_rotate %42 by %c32_i32_16 dim 1 : vector<4x128xf32>, i32 -> vector<4x128xf32>
    %44 = arith.mulf %40, %30 : vector<4x128xf32>
    %45 = arith.addf %44, %43 : vector<4x128xf32>
    %46 = math.tanh %45 : vector<4x128xf32>
    %47 = arith.mulf %41, %46 : vector<4x128xf32>
    %48 = vector.extract_strided_slice %5 {offsets = [8, 0], sizes = [4, 128], strides = [1, 1]} : vector<32x128xf32> to vector<4x128xf32>
    %cst_17 = arith.constant dense<0.000000e+00> : vector<4x128xf32>
    %49 = tpu.matmul %47, %6, %cst_17 {dimension_numbers = #tpu.dot_dimension_numbers<[1], [0], [0], [1], [0, 0, 1, 1], [], []>} : vector<4x128xf32>, vector<128x128xf32>, vector<4x128xf32> -> vector<4x128xf32>
    %50 = arith.addf %48, %49 : vector<4x128xf32>
    %51 = math.tanh %50 : vector<4x128xf32>
    %52 = vector.broadcast %12 : vector<1x128xf32> to vector<4x128xf32>
    %53 = arith.mulf %51, %52 : vector<4x128xf32>
    %54 = vector.broadcast %15 : vector<1x128xf32> to vector<4x128xf32>
    %55 = arith.addf %53, %54 : vector<4x128xf32>
    %c64_i32_18 = arith.constant 64 : i32
    %56 = tpu.dynamic_rotate %55 by %c64_i32_18 dim 1 : vector<4x128xf32>, i32 -> vector<4x128xf32>
    %57 = arith.mulf %55, %56 : vector<4x128xf32>
    %c32_i32_19 = arith.constant 32 : i32
    %58 = tpu.dynamic_rotate %57 by %c32_i32_19 dim 1 : vector<4x128xf32>, i32 -> vector<4x128xf32>
    %59 = arith.mulf %55, %45 : vector<4x128xf32>
    %60 = arith.addf %59, %58 : vector<4x128xf32>
    %61 = math.tanh %60 : vector<4x128xf32>
    %62 = arith.mulf %56, %61 : vector<4x128xf32>
    %63 = vector.extract_strided_slice %5 {offsets = [12, 0], sizes = [4, 128], strides = [1, 1]} : vector<32x128xf32> to vector<4x128xf32>
    %cst_20 = arith.constant dense<0.000000e+00> : vector<4x128xf32>
    %64 = tpu.matmul %62, %6, %cst_20 {dimension_numbers = #tpu.dot_dimension_numbers<[1], [0], [0], [1], [0, 0, 1, 1], [], []>} : vector<4x128xf32>, vector<128x128xf32>, vector<4x128xf32> -> vector<4x128xf32>
    %65 = arith.addf %63, %64 : vector<4x128xf32>
    %66 = math.tanh %65 : vector<4x128xf32>
    %67 = vector.broadcast %12 : vector<1x128xf32> to vector<4x128xf32>
    %68 = arith.mulf %66, %67 : vector<4x128xf32>
    %69 = vector.broadcast %15 : vector<1x128xf32> to vector<4x128xf32>
    %70 = arith.addf %68, %69 : vector<4x128xf32>
    %c64_i32_21 = arith.constant 64 : i32
    %71 = tpu.dynamic_rotate %70 by %c64_i32_21 dim 1 : vector<4x128xf32>, i32 -> vector<4x128xf32>
    %72 = arith.mulf %70, %71 : vector<4x128xf32>
    %c32_i32_22 = arith.constant 32 : i32
    %73 = tpu.dynamic_rotate %72 by %c32_i32_22 dim 1 : vector<4x128xf32>, i32 -> vector<4x128xf32>
    %74 = arith.mulf %70, %60 : vector<4x128xf32>
    %75 = arith.addf %74, %73 : vector<4x128xf32>
    %76 = math.tanh %75 : vector<4x128xf32>
    %77 = arith.mulf %71, %76 : vector<4x128xf32>
    %78 = vector.extract_strided_slice %5 {offsets = [16, 0], sizes = [4, 128], strides = [1, 1]} : vector<32x128xf32> to vector<4x128xf32>
    %cst_23 = arith.constant dense<0.000000e+00> : vector<4x128xf32>
    %79 = tpu.matmul %77, %6, %cst_23 {dimension_numbers = #tpu.dot_dimension_numbers<[1], [0], [0], [1], [0, 0, 1, 1], [], []>} : vector<4x128xf32>, vector<128x128xf32>, vector<4x128xf32> -> vector<4x128xf32>
    %80 = arith.addf %78, %79 : vector<4x128xf32>
    %81 = math.tanh %80 : vector<4x128xf32>
    %82 = vector.broadcast %12 : vector<1x128xf32> to vector<4x128xf32>
    %83 = arith.mulf %81, %82 : vector<4x128xf32>
    %84 = vector.broadcast %15 : vector<1x128xf32> to vector<4x128xf32>
    %85 = arith.addf %83, %84 : vector<4x128xf32>
    %c64_i32_24 = arith.constant 64 : i32
    %86 = tpu.dynamic_rotate %85 by %c64_i32_24 dim 1 : vector<4x128xf32>, i32 -> vector<4x128xf32>
    %87 = arith.mulf %85, %86 : vector<4x128xf32>
    %c32_i32_25 = arith.constant 32 : i32
    %88 = tpu.dynamic_rotate %87 by %c32_i32_25 dim 1 : vector<4x128xf32>, i32 -> vector<4x128xf32>
    %89 = arith.mulf %85, %75 : vector<4x128xf32>
    %90 = arith.addf %89, %88 : vector<4x128xf32>
    %91 = math.tanh %90 : vector<4x128xf32>
    %92 = arith.mulf %86, %91 : vector<4x128xf32>
    %93 = vector.extract_strided_slice %5 {offsets = [20, 0], sizes = [4, 128], strides = [1, 1]} : vector<32x128xf32> to vector<4x128xf32>
    %cst_26 = arith.constant dense<0.000000e+00> : vector<4x128xf32>
    %94 = tpu.matmul %92, %6, %cst_26 {dimension_numbers = #tpu.dot_dimension_numbers<[1], [0], [0], [1], [0, 0, 1, 1], [], []>} : vector<4x128xf32>, vector<128x128xf32>, vector<4x128xf32> -> vector<4x128xf32>
    %95 = arith.addf %93, %94 : vector<4x128xf32>
    %96 = math.tanh %95 : vector<4x128xf32>
    %97 = vector.broadcast %12 : vector<1x128xf32> to vector<4x128xf32>
    %98 = arith.mulf %96, %97 : vector<4x128xf32>
    %99 = vector.broadcast %15 : vector<1x128xf32> to vector<4x128xf32>
    %100 = arith.addf %98, %99 : vector<4x128xf32>
    %c64_i32_27 = arith.constant 64 : i32
    %101 = tpu.dynamic_rotate %100 by %c64_i32_27 dim 1 : vector<4x128xf32>, i32 -> vector<4x128xf32>
    %102 = arith.mulf %100, %101 : vector<4x128xf32>
    %c32_i32_28 = arith.constant 32 : i32
    %103 = tpu.dynamic_rotate %102 by %c32_i32_28 dim 1 : vector<4x128xf32>, i32 -> vector<4x128xf32>
    %104 = arith.mulf %100, %90 : vector<4x128xf32>
    %105 = arith.addf %104, %103 : vector<4x128xf32>
    %106 = math.tanh %105 : vector<4x128xf32>
    %107 = arith.mulf %101, %106 : vector<4x128xf32>
    %108 = vector.extract_strided_slice %5 {offsets = [24, 0], sizes = [4, 128], strides = [1, 1]} : vector<32x128xf32> to vector<4x128xf32>
    %cst_29 = arith.constant dense<0.000000e+00> : vector<4x128xf32>
    %109 = tpu.matmul %107, %6, %cst_29 {dimension_numbers = #tpu.dot_dimension_numbers<[1], [0], [0], [1], [0, 0, 1, 1], [], []>} : vector<4x128xf32>, vector<128x128xf32>, vector<4x128xf32> -> vector<4x128xf32>
    %110 = arith.addf %108, %109 : vector<4x128xf32>
    %111 = math.tanh %110 : vector<4x128xf32>
    %112 = vector.broadcast %12 : vector<1x128xf32> to vector<4x128xf32>
    %113 = arith.mulf %111, %112 : vector<4x128xf32>
    %114 = vector.broadcast %15 : vector<1x128xf32> to vector<4x128xf32>
    %115 = arith.addf %113, %114 : vector<4x128xf32>
    %c64_i32_30 = arith.constant 64 : i32
    %116 = tpu.dynamic_rotate %115 by %c64_i32_30 dim 1 : vector<4x128xf32>, i32 -> vector<4x128xf32>
    %117 = arith.mulf %115, %116 : vector<4x128xf32>
    %c32_i32_31 = arith.constant 32 : i32
    %118 = tpu.dynamic_rotate %117 by %c32_i32_31 dim 1 : vector<4x128xf32>, i32 -> vector<4x128xf32>
    %119 = arith.mulf %115, %105 : vector<4x128xf32>
    %120 = arith.addf %119, %118 : vector<4x128xf32>
    %121 = math.tanh %120 : vector<4x128xf32>
    %122 = arith.mulf %116, %121 : vector<4x128xf32>
    %123 = vector.extract_strided_slice %5 {offsets = [28, 0], sizes = [4, 128], strides = [1, 1]} : vector<32x128xf32> to vector<4x128xf32>
    %cst_32 = arith.constant dense<0.000000e+00> : vector<4x128xf32>
    %124 = tpu.matmul %122, %6, %cst_32 {dimension_numbers = #tpu.dot_dimension_numbers<[1], [0], [0], [1], [0, 0, 1, 1], [], []>} : vector<4x128xf32>, vector<128x128xf32>, vector<4x128xf32> -> vector<4x128xf32>
    %125 = arith.addf %123, %124 : vector<4x128xf32>
    %126 = math.tanh %125 : vector<4x128xf32>
    %127 = vector.broadcast %12 : vector<1x128xf32> to vector<4x128xf32>
    %128 = arith.mulf %126, %127 : vector<4x128xf32>
    %129 = vector.broadcast %15 : vector<1x128xf32> to vector<4x128xf32>
    %130 = arith.addf %128, %129 : vector<4x128xf32>
    %c64_i32_33 = arith.constant 64 : i32
    %131 = tpu.dynamic_rotate %130 by %c64_i32_33 dim 1 : vector<4x128xf32>, i32 -> vector<4x128xf32>
    %132 = arith.mulf %130, %131 : vector<4x128xf32>
    %c32_i32_34 = arith.constant 32 : i32
    %133 = tpu.dynamic_rotate %132 by %c32_i32_34 dim 1 : vector<4x128xf32>, i32 -> vector<4x128xf32>
    %134 = arith.mulf %130, %120 : vector<4x128xf32>
    %135 = arith.addf %134, %133 : vector<4x128xf32>
    %136 = math.tanh %135 : vector<4x128xf32>
    %137 = arith.mulf %131, %136 : vector<4x128xf32>
    %c0_35 = arith.constant 0 : index
    %c0_36 = arith.constant 0 : index
    %138 = vector.load %arg4[%c0_35, %c0_36] : memref<128x128xf32, #tpu.memory_space<vmem>>, vector<128x128xf32>
    %cst_37 = arith.constant dense<0.000000e+00> : vector<4x128xf32>
    %139 = tpu.matmul %137, %138, %cst_37 {dimension_numbers = #tpu.dot_dimension_numbers<[1], [0], [0], [1], [0, 0, 1, 1], [], []>} : vector<4x128xf32>, vector<128x128xf32>, vector<4x128xf32> -> vector<4x128xf32>
    %c0_38 = arith.constant 0 : index
    %c0_39 = arith.constant 0 : index
    %140 = vector.load %arg5[%c0_38, %c0_39] : memref<1x128xf32, #tpu.memory_space<vmem>>, vector<1x128xf32>
    %141 = vector.broadcast %140 : vector<1x128xf32> to vector<4x128xf32>
    %142 = arith.addf %139, %141 : vector<4x128xf32>
    %c0_40 = arith.constant 0 : index
    %c0_41 = arith.constant 0 : index
    %143 = vector.load %arg6[%c0_40, %c0_41] : memref<4x128xf32, #tpu.memory_space<vmem>>, vector<4x128xf32>
    tpu.vector_store %arg6[%c0_40, %c0_41], %142 {strides = array<i32>} : memref<4x128xf32, #tpu.memory_space<vmem>>, vector<4x128xf32>,
    return
  }
}

</mosaic_0001>

<llo_original>
// kernel: lstm_model_forward.1
$region0: #{lstm_model_forward.1}
  #allocation0 [shape = 'u32[]', space=smem, size = 0x4, offset = 0x4, fixed_abs, tag = 'smem constant byte address 0x4 - core index']
  #allocation1 [shape = 'u32[144,128]{1,0:T(1,128)}', space=vmem, size = 0x12000, scoped, tag = 'internal scratch']
  %s0 = inlined_call_operand.vmem [shape: f32[32,16], index: 0, kind: input, shape index: {}]
  %s1 = inlined_call_operand.vmem [shape: f32[16,128], index: 1, kind: input, shape index: {}]
  %s2 = inlined_call_operand.hbm [shape: f32[128,128], index: 2, kind: input, shape index: {}]
  %s3 = inlined_call_operand.vmem [shape: f32[1,128], index: 3, kind: input, shape index: {}]
  %s4 = inlined_call_operand.hbm [shape: f32[128,128], index: 4, kind: input, shape index: {}]
  %s5 = inlined_call_operand.vmem [shape: f32[1,128], index: 5, kind: input, shape index: {}]
  %s6 = inlined_call_operand.hbm [shape: f32[4,128], index: 6, kind: output, shape index: {}]
  %s7 = sld [smem:[#allocation0]]
  $region42: #{lstm_model_forward.1} parent=0
    _
  %s9 = ssub.s32 1, %s7
  %s10 = scalar_select 0, %s9, %s7
  $region1: #{lstm_model_forward.1} parent=0
    #allocation2 [shape = 'u8[65536]{0}', space=vmem, size = 0x10000, scoped, tag = 'input window, operand 2, single buffered']
    #allocation3 [shape = 's32[1]{0}', space=sflag, size = 0x4, scoped, tag = 'scoped memory for lstm_model_forward.1']
    #allocation4 [shape = 's32[1]{0}', space=sflag, size = 0x4, scoped, tag = 'scoped memory for lstm_model_forward.1']
    #allocation5 [shape = 'u8[65536]{0}', space=vmem, size = 0x10000, scoped, tag = 'input window, operand 4, single buffered']
    #allocation6 [shape = 's32[1]{0}', space=sflag, size = 0x4, scoped, tag = 'scoped memory for lstm_model_forward.1']
    #allocation7 [shape = 'u8[2048]{0}', space=vmem, size = 0x800, scoped, tag = 'output window, operand 0, single buffered']
    %11 = vsyncpa [#allocation3], 0
    %12 = vsyncpa [#allocation6], 0
    %13 = vsyncpa [#allocation4], 0
    // Predicated region
    $region2: #{lstm_model_forward.1} parent=1 // pred_check
      _
    $region3: #{lstm_model_forward.1} parent=1 // pred_check_branch
      %15 = sbr.rel (0) target = $region5
    $region4: #{lstm_model_forward.1} parent=1 // pred_region
      _
    $region5: #{lstm_model_forward.1} parent=1 // pred_fallthru
      _
    // Predicated region
    $region6: #{lstm_model_forward.1} parent=1 // pred_check
      _
    $region7: #{lstm_model_forward.1} parent=1 // pred_check_branch
      %17 = sbr.rel (0) target = $region9
    $region8: #{lstm_model_forward.1} parent=1 // pred_region
      _
    $region9: #{lstm_model_forward.1} parent=1 // pred_fallthru
      _
    // Predicated region
    $region10: #{lstm_model_forward.1} parent=1 // pred_check
      _
    $region11: #{lstm_model_forward.1} parent=1 // pred_check_branch
      %19 = sbr.rel (0) target = $region13
    $region12: #{lstm_model_forward.1} parent=1 // pred_region
      %s21 = ssub.s32 2048, 2048
      %22 = vsyncadd [#allocation3], %s21
      %s23 = sshll.u32 [#allocation2], 4
      %s24 = int_to_ptr.vmem [resolvable:$true] %s23
      %29 = dma.hbm_to_vmem [thread:$0]  %s2, 2048, %s24, [#allocation3], 128, 128, 8
    $region13: #{lstm_model_forward.1} parent=1 // pred_fallthru
      _
    // Predicated region
    $region14: #{lstm_model_forward.1} parent=1 // pred_check
      _
    $region15: #{lstm_model_forward.1} parent=1 // pred_check_branch
      %31 = sbr.rel (0) target = $region17
    $region16: #{lstm_model_forward.1} parent=1 // pred_region
      _
    $region17: #{lstm_model_forward.1} parent=1 // pred_fallthru
      _
    // Predicated region
    $region18: #{lstm_model_forward.1} parent=1 // pred_check
      _
    $region19: #{lstm_model_forward.1} parent=1 // pred_check_branch
      %33 = sbr.rel (0) target = $region21
    $region20: #{lstm_model_forward.1} parent=1 // pred_region
      %s35 = ssub.s32 2048, 2048
      %36 = vsyncadd [#allocation6], %s35
      %s37 = sshll.u32 [#allocation5], 4
      %s38 = int_to_ptr.vmem [resolvable:$true] %s37
      %43 = dma.hbm_to_vmem [thread:$0]  %s4, 2048, %s38, [#allocation6], 128, 128, 8
    $region21: #{lstm_model_forward.1} parent=1 // pred_fallthru
      _
    // Predicated region
    $region22: #{lstm_model_forward.1} parent=1 // pred_check
      _
    $region23: #{lstm_model_forward.1} parent=1 // pred_check_branch
      %45 = sbr.rel (0) target = $region25
    $region24: #{lstm_model_forward.1} parent=1 // pred_region
      _
    $region25: #{lstm_model_forward.1} parent=1 // pred_fallthru
      _
    // Predicated region
    $region26: #{lstm_model_forward.1} parent=1 // pred_check
      _
    $region27: #{lstm_model_forward.1} parent=1 // pred_check_branch
      %47 = sbr.rel (0) target = $region29
    $region28: #{lstm_model_forward.1} parent=1 // pred_region
      %48 = dma.done [#allocation3], 2048
    $region29: #{lstm_model_forward.1} parent=1 // pred_fallthru
      _
    // Predicated region
    $region30: #{lstm_model_forward.1} parent=1 // pred_check
      _
    $region31: #{lstm_model_forward.1} parent=1 // pred_check_branch
      %50 = sbr.rel (0) target = $region33
    $region32: #{lstm_model_forward.1} parent=1 // pred_region
      %51 = dma.done [#allocation6], 2048
    $region33: #{lstm_model_forward.1} parent=1 // pred_fallthru
      _
    %v52 = vld [vmem:[%s0] sm:$0xff]
    %v53 = vld [vmem:[%s0 + $0x8] sm:$0xff]
    %v54 = vld [vmem:[%s0 + $0x10] sm:$0xff]
    %v55 = vld [vmem:[%s0 + $0x18] sm:$0xff]
    %v56 = vld [vmem:[%s1] sm:$0xff]
    %v57 = vld [vmem:[%s1 + $0x8] sm:$0xff]
    %v58 = vld [vmem:[%s3] sm:$0x1]
    %v60 = vlaneseq
    %v61 = vshrl.u32 %v60, 7
    %v62 = vsub.s32 0, %v61
    %v63 = vrot.slane %v58, %v62
    %vm65 = vcmask 130048
    %v67 = vsel %vm65, %v52, 0
    %v70 = vsel %vm65, %v53, 0
    %v73 = vsel %vm65, %v54, 0
    %v76 = vsel %vm65, %v55, 0
    %78 = vmatprep.subr.mxu0 0.0
    %79 = vmatpush1.msra.mxu0 %v56
    %80 = vmatprep.subr.mxu0 0.0
    %81 = vmatpush1.msra.mxu0 %v57
    %82 = vmatprep.subr.mxu0 0.0
    %83 = vmatpush1.msra.mxu0 0.0
    %84 = vmatprep.subr.mxu0 0.0
    %85 = vmatpush1.msra.mxu0 0.0
    %86 = vmatprep.subr.mxu0 0.0
    %87 = vmatpush1.msra.mxu0 0.0
    %88 = vmatprep.subr.mxu0 0.0
    %89 = vmatpush1.msra.mxu0 0.0
    %90 = vmatprep.subr.mxu0 0.0
    %91 = vmatpush1.msra.mxu0 0.0
    %92 = vmatprep.subr.mxu0 0.0
    %93 = vmatpush1.msra.mxu0 0.0
    %94 = vmatprep.subr.mxu0 0.0
    %95 = vmatpush1.msra.mxu0 0.0
    %96 = vmatprep.subr.mxu0 0.0
    %97 = vmatpush1.msra.mxu0 0.0
    %98 = vmatprep.subr.mxu0 0.0
    %99 = vmatpush1.msra.mxu0 0.0
    %100 = vmatprep.subr.mxu0 0.0
    %101 = vmatpush1.msra.mxu0 0.0
    %102 = vmatprep.subr.mxu0 0.0
    %103 = vmatpush1.msra.mxu0 0.0
    %104 = vmatprep.subr.mxu0 0.0
    %105 = vmatpush1.msra.mxu0 0.0
    %106 = vmatprep.subr.mxu0 0.0
    %107 = vmatpush1.msra.mxu0 0.0
    %108 = vmatprep.subr.mxu0 0.0
    %109 = vmatpush1.msra.mxu0 0.0
    %110 = vmatprep.subr.mxu0 0.0
    %111 = vmatpush1.msra.mxu0 0.0
    %112 = vmatprep.subr.mxu0 0.0
    %113 = vmatpush1.msra.mxu0 0.0
    %114 = vmatprep.subr.mxu0 0.0
    %115 = vmatpush1.msra.mxu0 0.0
    %116 = vmatprep.subr.mxu0 0.0
    %117 = vmatpush1.msra.mxu0 0.0
    %118 = vmatprep.subr.mxu0 0.0
    %119 = vmatpush1.msra.mxu0 0.0
    %120 = vmatprep.subr.mxu0 0.0
    %121 = vmatpush1.msra.mxu0 0.0
    %122 = vmatprep.subr.mxu0 0.0
    %123 = vmatpush1.msra.mxu0 0.0
    %124 = vmatprep.subr.mxu0 0.0
    %125 = vmatpush1.msra.mxu0 0.0
    %126 = vmatprep.subr.mxu0 0.0
    %127 = vmatpush1.msra.mxu0 0.0
    %128 = vmatprep.subr.mxu0 0.0
    %129 = vmatpush1.msra.mxu0 0.0
    %130 = vmatprep.subr.mxu0 0.0
    %131 = vmatpush1.msra.mxu0 0.0
    %132 = vmatprep.subr.mxu0 0.0
    %133 = vmatpush1.msra.mxu0 0.0
    %134 = vmatprep.subr.mxu0 0.0
    %135 = vmatpush1.msra.mxu0 0.0
    %136 = vmatprep.subr.mxu0 0.0
    %137 = vmatpush1.msra.mxu0 0.0
    %138 = vmatprep.subr.mxu0 0.0
    %139 = vmatpush1.msra.mxu0 0.0
    %140 = vmatprep.subr.mxu0 0.0
    %141 = vmatpush1.msra.mxu0 0.0
    %142 = vmatprep.mubr.f32.mxu0 0.0
    %143 = vmatmul.mubr.f32.gmra.mrb[0].mxu0 %v67
    %v144 = vpop.f32.mrb[0].mxu0
    %v145 = vadd.f32 %v63, %v144
    %v146 = vpop.f32.mrb[0].mxu0
    %147 = vmatprep.mubr.f32.mxu0 0.0
    %148 = vmatmul.mubr.f32.gmra.mrb[0].mxu0 %v70
    %v149 = vpop.f32.mrb[0].mxu0
    %v150 = vadd.f32 %v63, %v149
    %v151 = vpop.f32.mrb[0].mxu0
    %152 = vmatprep.mubr.f32.mxu0 0.0
    %153 = vmatmul.mubr.f32.gmra.mrb[0].mxu0 %v73
    %v154 = vpop.f32.mrb[0].mxu0
    %v155 = vadd.f32 %v63, %v154
    %v156 = vpop.f32.mrb[0].mxu0
    %157 = vmatprep.mubr.f32.mxu0 0.0
    %158 = vmatmul.mubr.f32.gmra.mrb[0].mxu0 %v76
    %v159 = vpop.f32.mrb[0].mxu0
    %v160 = vadd.f32 %v63, %v159
    %v161 = vpop.f32.mrb[0].mxu0
    %162 = vdwg.mxu0
    %v163 = vld [vmem:[#allocation2] sm:$0xff]
    %v164 = vld [vmem:[#allocation2 + $0x8] sm:$0xff]
    %v165 = vld [vmem:[#allocation2 + $0x10] sm:$0xff]
    %v166 = vld [vmem:[#allocation2 + $0x18] sm:$0xff]
    %v167 = vld [vmem:[#allocation2 + $0x20] sm:$0xff]
    %v168 = vld [vmem:[#allocation2 + $0x28] sm:$0xff]
    %v169 = vld [vmem:[#allocation2 + $0x30] sm:$0xff]
    %v170 = vld [vmem:[#allocation2 + $0x38] sm:$0xff]
    %v171 = vld [vmem:[#allocation2 + $0x40] sm:$0xff]
    %v172 = vld [vmem:[#allocation2 + $0x48] sm:$0xff]
    %v173 = vld [vmem:[#allocation2 + $0x50] sm:$0xff]
    %v174 = vld [vmem:[#allocation2 + $0x58] sm:$0xff]
    %v175 = vld [vmem:[#allocation2 + $0x60] sm:$0xff]
    %v176 = vld [vmem:[#allocation2 + $0x68] sm:$0xff]
    %v177 = vld [vmem:[#allocation2 + $0x70] sm:$0xff]
    %v178 = vld [vmem:[#allocation2 + $0x78] sm:$0xff]
    %v179 = vlaneseq
    %v180 = vand.u32 %v179, 127
    %vm181 = vcmp.ge.s32.totalorder %v180, 96
    %v182 = vsel %vm181, 1.0, 0.5
    %v183 = vsel %vm181, 0.0, 0.5
    %184 = vmatprep.subr.mxu0 0.0
    %185 = vmatpush1.msra.mxu0 %v163
    %186 = vmatprep.subr.mxu0 0.0
    %187 = vmatpush1.msra.mxu0 %v164
    %188 = vmatprep.subr.mxu0 0.0
    %189 = vmatpush1.msra.mxu0 %v165
    %190 = vmatprep.subr.mxu0 0.0
    %191 = vmatpush1.msra.mxu0 %v166
    %192 = vmatprep.subr.mxu0 0.0
    %193 = vmatpush1.msra.mxu0 %v167
    %194 = vmatprep.subr.mxu0 0.0
    %195 = vmatpush1.msra.mxu0 %v168
    %196 = vmatprep.subr.mxu0 0.0
    %197 = vmatpush1.msra.mxu0 %v169
    %198 = vmatprep.subr.mxu0 0.0
    %199 = vmatpush1.msra.mxu0 %v170
    %200 = vmatprep.subr.mxu0 0.0
    %201 = vmatpush1.msra.mxu0 %v171
    %202 = vmatprep.subr.mxu0 0.0
    %203 = vmatpush1.msra.mxu0 %v172
    %204 = vmatprep.subr.mxu0 0.0
    %205 = vmatpush1.msra.mxu0 %v173
    %206 = vmatprep.subr.mxu0 0.0
    %207 = vmatpush1.msra.mxu0 %v174
    %208 = vmatprep.subr.mxu0 0.0
    %209 = vmatpush1.msra.mxu0 %v175
    %210 = vmatprep.subr.mxu0 0.0
    %211 = vmatpush1.msra.mxu0 %v176
    %212 = vmatprep.subr.mxu0 0.0
    %213 = vmatpush1.msra.mxu0 %v177
    %214 = vmatprep.subr.mxu0 0.0
    %215 = vmatpush1.msra.mxu0 %v178
    %216 = vmatprep.subr.mxu0 0.0
    %217 = vmatpush1.msra.mxu0 0.0
    %218 = vmatprep.subr.mxu0 0.0
    %219 = vmatpush1.msra.mxu0 0.0
    %220 = vmatprep.subr.mxu0 0.0
    %221 = vmatpush1.msra.mxu0 0.0
    %222 = vmatprep.subr.mxu0 0.0
    %223 = vmatpush1.msra.mxu0 0.0
    %224 = vmatprep.subr.mxu0 0.0
    %225 = vmatpush1.msra.mxu0 0.0
    %226 = vmatprep.subr.mxu0 0.0
    %227 = vmatpush1.msra.mxu0 0.0
    %228 = vmatprep.subr.mxu0 0.0
    %229 = vmatpush1.msra.mxu0 0.0
    %230 = vmatprep.subr.mxu0 0.0
    %231 = vmatpush1.msra.mxu0 0.0
    %232 = vmatprep.subr.mxu0 0.0
    %233 = vmatpush1.msra.mxu0 0.0
    %234 = vmatprep.subr.mxu0 0.0
    %235 = vmatpush1.msra.mxu0 0.0
    %236 = vmatprep.subr.mxu0 0.0
    %237 = vmatpush1.msra.mxu0 0.0
    %238 = vmatprep.subr.mxu0 0.0
    %239 = vmatpush1.msra.mxu0 0.0
    %240 = vmatprep.subr.mxu0 0.0
    %241 = vmatpush1.msra.mxu0 0.0
    %242 = vmatprep.subr.mxu0 0.0
    %243 = vmatpush1.msra.mxu0 0.0
    %244 = vmatprep.subr.mxu0 0.0
    %245 = vmatpush1.msra.mxu0 0.0
    %246 = vmatprep.subr.mxu0 0.0
    %247 = vmatpush1.msra.mxu0 0.0
    %248 = vmatprep.mubr.f32.mxu0 0.0
    %249 = vmatmul.mubr.f32.gmra.mrb[0].mxu0 0.0
    %v250 = vpop.f32.mrb[0].mxu0
    %v251 = vadd.f32 0.0, %v250
    %v252 = vpop.f32.mrb[0].mxu0
    %253 = vdwg.mxu0
    %v254 = vadd.f32 %v145, %v251
    %v255 = vtanh.pop %v254
    %v256 = vmul.f32 %v255, %v182
    %v257 = vadd.f32 %v256, %v183
    %258 = vrot.lane.b32.xlu0 %v257, 64
    %v259 = vpop.permute.xlu0 %258
    %v260 = vmul.f32 %v257, %v259
    %261 = vrot.lane.b32.xlu0 %v260, 32
    %v262 = vpop.permute.xlu0 %261
    %v263 = vmul.f32 %v257, 0.0
    %v264 = vadd.f32 %v263, %v262
    %v265 = vtanh.pop %v264
    %v266 = vmul.f32 %v259, %v265
    %267 = vmatprep.subr.mxu0 0.0
    %268 = vmatpush1.msra.mxu0 %v163
    %269 = vmatprep.subr.mxu0 0.0
    %270 = vmatpush1.msra.mxu0 %v164
    %271 = vmatprep.subr.mxu0 0.0
    %272 = vmatpush1.msra.mxu0 %v165
    %273 = vmatprep.subr.mxu0 0.0
    %274 = vmatpush1.msra.mxu0 %v166
    %275 = vmatprep.subr.mxu0 0.0
    %276 = vmatpush1.msra.mxu0 %v167
    %277 = vmatprep.subr.mxu0 0.0
    %278 = vmatpush1.msra.mxu0 %v168
    %279 = vmatprep.subr.mxu0 0.0
    %280 = vmatpush1.msra.mxu0 %v169
    %281 = vmatprep.subr.mxu0 0.0
    %282 = vmatpush1.msra.mxu0 %v170
    %283 = vmatprep.subr.mxu0 0.0
    %284 = vmatpush1.msra.mxu0 %v171
    %285 = vmatprep.subr.mxu0 0.0
    %286 = vmatpush1.msra.mxu0 %v172
    %287 = vmatprep.subr.mxu0 0.0
    %288 = vmatpush1.msra.mxu0 %v173
    %289 = vmatprep.subr.mxu0 0.0
    %290 = vmatpush1.msra.mxu0 %v174
    %291 = vmatprep.subr.mxu0 0.0
    %292 = vmatpush1.msra.mxu0 %v175
    %293 = vmatprep.subr.mxu0 0.0
    %294 = vmatpush1.msra.mxu0 %v176
    %295 = vmatprep.subr.mxu0 0.0
    %296 = vmatpush1.msra.mxu0 %v177
    %297 = vmatprep.subr.mxu0 0.0
    %298 = vmatpush1.msra.mxu0 %v178
    %299 = vmatprep.subr.mxu0 0.0
    %300 = vmatpush1.msra.mxu0 0.0
    %301 = vmatprep.subr.mxu0 0.0
    %302 = vmatpush1.msra.mxu0 0.0
    %303 = vmatprep.subr.mxu0 0.0
    %304 = vmatpush1.msra.mxu0 0.0
    %305 = vmatprep.subr.mxu0 0.0
    %306 = vmatpush1.msra.mxu0 0.0
    %307 = vmatprep.subr.mxu0 0.0
    %308 = vmatpush1.msra.mxu0 0.0
    %309 = vmatprep.subr.mxu0 0.0
    %310 = vmatpush1.msra.mxu0 0.0
    %311 = vmatprep.subr.mxu0 0.0
    %312 = vmatpush1.msra.mxu0 0.0
    %313 = vmatprep.subr.mxu0 0.0
    %314 = vmatpush1.msra.mxu0 0.0
    %315 = vmatprep.subr.mxu0 0.0
    %316 = vmatpush1.msra.mxu0 0.0
    %317 = vmatprep.subr.mxu0 0.0
    %318 = vmatpush1.msra.mxu0 0.0
    %319 = vmatprep.subr.mxu0 0.0
    %320 = vmatpush1.msra.mxu0 0.0
    %321 = vmatprep.subr.mxu0 0.0
    %322 = vmatpush1.msra.mxu0 0.0
    %323 = vmatprep.subr.mxu0 0.0
    %324 = vmatpush1.msra.mxu0 0.0
    %325 = vmatprep.subr.mxu0 0.0
    %326 = vmatpush1.msra.mxu0 0.0
    %327 = vmatprep.subr.mxu0 0.0
    %328 = vmatpush1.msra.mxu0 0.0
    %329 = vmatprep.subr.mxu0 0.0
    %330 = vmatpush1.msra.mxu0 0.0
    %331 = vmatprep.mubr.f32.mxu0 0.0
    %332 = vmatmul.mubr.f32.gmra.mrb[0].mxu0 %v266
    %v333 = vpop.f32.mrb[0].mxu0
    %v334 = vadd.f32 0.0, %v333
    %v335 = vpop.f32.mrb[0].mxu0
    %336 = vdwg.mxu0
    %v338 = vrot.slane %v334, 4
    %v340 = vadd.f32 %v145, %v338
    %v341 = vtanh.pop %v340
    %v342 = vmul.f32 %v341, %v182
    %v343 = vadd.f32 %v342, %v183
    %v345 = vrot.slane %v343, 4
    %347 = vrot.lane.b32.xlu0 %v345, 64
    %v348 = vpop.permute.xlu0 %347
    %v350 = vrot.slane %v348, 4
    %v352 = vmul.f32 %v343, %v350
    %v354 = vrot.slane %v352, 4
    %356 = vrot.lane.b32.xlu0 %v354, 32
    %v357 = vpop.permute.xlu0 %356
    %v359 = vrot.slane %v264, 4
    %v361 = vmul.f32 %v343, %v359
    %v363 = vrot.slane %v357, 4
    %v365 = vadd.f32 %v361, %v363
    %v366 = vtanh.pop %v365
    %v368 = vrot.slane %v366, 4
    %v370 = vmul.f32 %v348, %v368
    %371 = vmatprep.subr.mxu0 0.0
    %372 = vmatpush1.msra.mxu0 %v163
    %373 = vmatprep.subr.mxu0 0.0
    %374 = vmatpush1.msra.mxu0 %v164
    %375 = vmatprep.subr.mxu0 0.0
    %376 = vmatpush1.msra.mxu0 %v165
    %377 = vmatprep.subr.mxu0 0.0
    %378 = vmatpush1.msra.mxu0 %v166
    %379 = vmatprep.subr.mxu0 0.0
    %380 = vmatpush1.msra.mxu0 %v167
    %381 = vmatprep.subr.mxu0 0.0
    %382 = vmatpush1.msra.mxu0 %v168
    %383 = vmatprep.subr.mxu0 0.0
    %384 = vmatpush1.msra.mxu0 %v169
    %385 = vmatprep.subr.mxu0 0.0
    %386 = vmatpush1.msra.mxu0 %v170
    %387 = vmatprep.subr.mxu0 0.0
    %388 = vmatpush1.msra.mxu0 %v171
    %389 = vmatprep.subr.mxu0 0.0
    %390 = vmatpush1.msra.mxu0 %v172
    %391 = vmatprep.subr.mxu0 0.0
    %392 = vmatpush1.msra.mxu0 %v173
    %393 = vmatprep.subr.mxu0 0.0
    %394 = vmatpush1.msra.mxu0 %v174
    %395 = vmatprep.subr.mxu0 0.0
    %396 = vmatpush1.msra.mxu0 %v175
    %397 = vmatprep.subr.mxu0 0.0
    %398 = vmatpush1.msra.mxu0 %v176
    %399 = vmatprep.subr.mxu0 0.0
    %400 = vmatpush1.msra.mxu0 %v177
    %401 = vmatprep.subr.mxu0 0.0
    %402 = vmatpush1.msra.mxu0 %v178
    %403 = vmatprep.subr.mxu0 0.0
    %404 = vmatpush1.msra.mxu0 0.0
    %405 = vmatprep.subr.mxu0 0.0
    %406 = vmatpush1.msra.mxu0 0.0
    %407 = vmatprep.subr.mxu0 0.0
    %408 = vmatpush1.msra.mxu0 0.0
    %409 = vmatprep.subr.mxu0 0.0
    %410 = vmatpush1.msra.mxu0 0.0
    %411 = vmatprep.subr.mxu0 0.0
    %412 = vmatpush1.msra.mxu0 0.0
    %413 = vmatprep.subr.mxu0 0.0
    %414 = vmatpush1.msra.mxu0 0.0
    %415 = vmatprep.subr.mxu0 0.0
    %416 = vmatpush1.msra.mxu0 0.0
    %417 = vmatprep.subr.mxu0 0.0
    %418 = vmatpush1.msra.mxu0 0.0
    %419 = vmatprep.subr.mxu0 0.0
    %420 = vmatpush1.msra.mxu0 0.0
    %421 = vmatprep.subr.mxu0 0.0
    %422 = vmatpush1.msra.mxu0 0.0
    %423 = vmatprep.subr.mxu0 0.0
    %424 = vmatpush1.msra.mxu0 0.0
    %425 = vmatprep.subr.mxu0 0.0
    %426 = vmatpush1.msra.mxu0 0.0
    %427 = vmatprep.subr.mxu0 0.0
    %428 = vmatpush1.msra.mxu0 0.0
    %429 = vmatprep.subr.mxu0 0.0
    %430 = vmatpush1.msra.mxu0 0.0
    %431 = vmatprep.subr.mxu0 0.0
    %432 = vmatpush1.msra.mxu0 0.0
    %433 = vmatprep.subr.mxu0 0.0
    %434 = vmatpush1.msra.mxu0 0.0
    %435 = vmatprep.mubr.f32.mxu0 0.0
    %436 = vmatmul.mubr.f32.gmra.mrb[0].mxu0 %v370
    %v437 = vpop.f32.mrb[0].mxu0
    %v438 = vadd.f32 0.0, %v437
    %v439 = vpop.f32.mrb[0].mxu0
    %440 = vdwg.mxu0
    %v441 = vadd.f32 %v150, %v438
    %v442 = vtanh.pop %v441
    %v443 = vmul.f32 %v442, %v182
    %v444 = vadd.f32 %v443, %v183
    %445 = vrot.lane.b32.xlu0 %v444, 64
    %v446 = vpop.permute.xlu0 %445
    %v447 = vmul.f32 %v444, %v446
    %448 = vrot.lane.b32.xlu0 %v447, 32
    %v449 = vpop.permute.xlu0 %448
    %v451 = vrot.slane %v365, 4
    %v453 = vmul.f32 %v444, %v451
    %v454 = vadd.f32 %v453, %v449
    %v455 = vtanh.pop %v454
    %v456 = vmul.f32 %v446, %v455
    %457 = vmatprep.subr.mxu0 0.0
    %458 = vmatpush1.msra.mxu0 %v163
    %459 = vmatprep.subr.mxu0 0.0
    %460 = vmatpush1.msra.mxu0 %v164
    %461 = vmatprep.subr.mxu0 0.0
    %462 = vmatpush1.msra.mxu0 %v165
    %463 = vmatprep.subr.mxu0 0.0
    %464 = vmatpush1.msra.mxu0 %v166
    %465 = vmatprep.subr.mxu0 0.0
    %466 = vmatpush1.msra.mxu0 %v167
    %467 = vmatprep.subr.mxu0 0.0
    %468 = vmatpush1.msra.mxu0 %v168
    %469 = vmatprep.subr.mxu0 0.0
    %470 = vmatpush1.msra.mxu0 %v169
    %471 = vmatprep.subr.mxu0 0.0
    %472 = vmatpush1.msra.mxu0 %v170
    %473 = vmatprep.subr.mxu0 0.0
    %474 = vmatpush1.msra.mxu0 %v171
    %475 = vmatprep.subr.mxu0 0.0
    %476 = vmatpush1.msra.mxu0 %v172
    %477 = vmatprep.subr.mxu0 0.0
    %478 = vmatpush1.msra.mxu0 %v173
    %479 = vmatprep.subr.mxu0 0.0
    %480 = vmatpush1.msra.mxu0 %v174
    %481 = vmatprep.subr.mxu0 0.0
    %482 = vmatpush1.msra.mxu0 %v175
    %483 = vmatprep.subr.mxu0 0.0
    %484 = vmatpush1.msra.mxu0 %v176
    %485 = vmatprep.subr.mxu0 0.0
    %486 = vmatpush1.msra.mxu0 %v177
    %487 = vmatprep.subr.mxu0 0.0
    %488 = vmatpush1.msra.mxu0 %v178
    %489 = vmatprep.subr.mxu0 0.0
    %490 = vmatpush1.msra.mxu0 0.0
    %491 = vmatprep.subr.mxu0 0.0
    %492 = vmatpush1.msra.mxu0 0.0
    %493 = vmatprep.subr.mxu0 0.0
    %494 = vmatpush1.msra.mxu0 0.0
    %495 = vmatprep.subr.mxu0 0.0
    %496 = vmatpush1.msra.mxu0 0.0
    %497 = vmatprep.subr.mxu0 0.0
    %498 = vmatpush1.msra.mxu0 0.0
    %499 = vmatprep.subr.mxu0 0.0
    %500 = vmatpush1.msra.mxu0 0.0
    %501 = vmatprep.subr.mxu0 0.0
    %502 = vmatpush1.msra.mxu0 0.0
    %503 = vmatprep.subr.mxu0 0.0
    %504 = vmatpush1.msra.mxu0 0.0
    %505 = vmatprep.subr.mxu0 0.0
    %506 = vmatpush1.msra.mxu0 0.0
    %507 = vmatprep.subr.mxu0 0.0
    %508 = vmatpush1.msra.mxu0 0.0
    %509 = vmatprep.subr.mxu0 0.0
    %510 = vmatpush1.msra.mxu0 0.0
    %511 = vmatprep.subr.mxu0 0.0
    %512 = vmatpush1.msra.mxu0 0.0
    %513 = vmatprep.subr.mxu0 0.0
    %514 = vmatpush1.msra.mxu0 0.0
    %515 = vmatprep.subr.mxu0 0.0
    %516 = vmatpush1.msra.mxu0 0.0
    %517 = vmatprep.subr.mxu0 0.0
    %518 = vmatpush1.msra.mxu0 0.0
    %519 = vmatprep.subr.mxu0 0.0
    %520 = vmatpush1.msra.mxu0 0.0
    %521 = vmatprep.mubr.f32.mxu0 0.0
    %522 = vmatmul.mubr.f32.gmra.mrb[0].mxu0 %v456
    %v523 = vpop.f32.mrb[0].mxu0
    %v524 = vadd.f32 0.0, %v523
    %v525 = vpop.f32.mrb[0].mxu0
    %526 = vdwg.mxu0
    %v528 = vrot.slane %v524, 4
    %v530 = vadd.f32 %v150, %v528
    %v531 = vtanh.pop %v530
    %v532 = vmul.f32 %v531, %v182
    %v533 = vadd.f32 %v532, %v183
    %v535 = vrot.slane %v533, 4
    %537 = vrot.lane.b32.xlu0 %v535, 64
    %v538 = vpop.permute.xlu0 %537
    %v540 = vrot.slane %v538, 4
    %v542 = vmul.f32 %v533, %v540
    %v544 = vrot.slane %v542, 4
    %546 = vrot.lane.b32.xlu0 %v544, 32
    %v547 = vpop.permute.xlu0 %546
    %v549 = vrot.slane %v454, 4
    %v551 = vmul.f32 %v533, %v549
    %v553 = vrot.slane %v547, 4
    %v555 = vadd.f32 %v551, %v553
    %v556 = vtanh.pop %v555
    %v558 = vrot.slane %v556, 4
    %v560 = vmul.f32 %v538, %v558
    %561 = vmatprep.subr.mxu0 0.0
    %562 = vmatpush1.msra.mxu0 %v163
    %563 = vmatprep.subr.mxu0 0.0
    %564 = vmatpush1.msra.mxu0 %v164
    %565 = vmatprep.subr.mxu0 0.0
    %566 = vmatpush1.msra.mxu0 %v165
    %567 = vmatprep.subr.mxu0 0.0
    %568 = vmatpush1.msra.mxu0 %v166
    %569 = vmatprep.subr.mxu0 0.0
    %570 = vmatpush1.msra.mxu0 %v167
    %571 = vmatprep.subr.mxu0 0.0
    %572 = vmatpush1.msra.mxu0 %v168
    %573 = vmatprep.subr.mxu0 0.0
    %574 = vmatpush1.msra.mxu0 %v169
    %575 = vmatprep.subr.mxu0 0.0
    %576 = vmatpush1.msra.mxu0 %v170
    %577 = vmatprep.subr.mxu0 0.0
    %578 = vmatpush1.msra.mxu0 %v171
    %579 = vmatprep.subr.mxu0 0.0
    %580 = vmatpush1.msra.mxu0 %v172
    %581 = vmatprep.subr.mxu0 0.0
    %582 = vmatpush1.msra.mxu0 %v173
    %583 = vmatprep.subr.mxu0 0.0
    %584 = vmatpush1.msra.mxu0 %v174
    %585 = vmatprep.subr.mxu0 0.0
    %586 = vmatpush1.msra.mxu0 %v175
    %587 = vmatprep.subr.mxu0 0.0
    %588 = vmatpush1.msra.mxu0 %v176
    %589 = vmatprep.subr.mxu0 0.0
    %590 = vmatpush1.msra.mxu0 %v177
    %591 = vmatprep.subr.mxu0 0.0
    %592 = vmatpush1.msra.mxu0 %v178
    %593 = vmatprep.subr.mxu0 0.0
    %594 = vmatpush1.msra.mxu0 0.0
    %595 = vmatprep.subr.mxu0 0.0
    %596 = vmatpush1.msra.mxu0 0.0
    %597 = vmatprep.subr.mxu0 0.0
    %598 = vmatpush1.msra.mxu0 0.0
    %599 = vmatprep.subr.mxu0 0.0
    %600 = vmatpush1.msra.mxu0 0.0
    %601 = vmatprep.subr.mxu0 0.0
    %602 = vmatpush1.msra.mxu0 0.0
    %603 = vmatprep.subr.mxu0 0.0
    %604 = vmatpush1.msra.mxu0 0.0
    %605 = vmatprep.subr.mxu0 0.0
    %606 = vmatpush1.msra.mxu0 0.0
    %607 = vmatprep.subr.mxu0 0.0
    %608 = vmatpush1.msra.mxu0 0.0
    %609 = vmatprep.subr.mxu0 0.0
    %610 = vmatpush1.msra.mxu0 0.0
    %611 = vmatprep.subr.mxu0 0.0
    %612 = vmatpush1.msra.mxu0 0.0
    %613 = vmatprep.subr.mxu0 0.0
    %614 = vmatpush1.msra.mxu0 0.0
    %615 = vmatprep.subr.mxu0 0.0
    %616 = vmatpush1.msra.mxu0 0.0
    %617 = vmatprep.subr.mxu0 0.0
    %618 = vmatpush1.msra.mxu0 0.0
    %619 = vmatprep.subr.mxu0 0.0
    %620 = vmatpush1.msra.mxu0 0.0
    %621 = vmatprep.subr.mxu0 0.0
    %622 = vmatpush1.msra.mxu0 0.0
    %623 = vmatprep.subr.mxu0 0.0
    %624 = vmatpush1.msra.mxu0 0.0
    %625 = vmatprep.mubr.f32.mxu0 0.0
    %626 = vmatmul.mubr.f32.gmra.mrb[0].mxu0 %v560
    %v627 = vpop.f32.mrb[0].mxu0
    %v628 = vadd.f32 0.0, %v627
    %v629 = vpop.f32.mrb[0].mxu0
    %630 = vdwg.mxu0
    %v631 = vadd.f32 %v155, %v628
    %v632 = vtanh.pop %v631
    %v633 = vmul.f32 %v632, %v182
    %v634 = vadd.f32 %v633, %v183
    %635 = vrot.lane.b32.xlu0 %v634, 64
    %v636 = vpop.permute.xlu0 %635
    %v637 = vmul.f32 %v634, %v636
    %638 = vrot.lane.b32.xlu0 %v637, 32
    %v639 = vpop.permute.xlu0 %638
    %v641 = vrot.slane %v555, 4
    %v643 = vmul.f32 %v634, %v641
    %v644 = vadd.f32 %v643, %v639
    %v645 = vtanh.pop %v644
    %v646 = vmul.f32 %v636, %v645
    %647 = vmatprep.subr.mxu0 0.0
    %648 = vmatpush1.msra.mxu0 %v163
    %649 = vmatprep.subr.mxu0 0.0
    %650 = vmatpush1.msra.mxu0 %v164
    %651 = vmatprep.subr.mxu0 0.0
    %652 = vmatpush1.msra.mxu0 %v165
    %653 = vmatprep.subr.mxu0 0.0
    %654 = vmatpush1.msra.mxu0 %v166
    %655 = vmatprep.subr.mxu0 0.0
    %656 = vmatpush1.msra.mxu0 %v167
    %657 = vmatprep.subr.mxu0 0.0
    %658 = vmatpush1.msra.mxu0 %v168
    %659 = vmatprep.subr.mxu0 0.0
    %660 = vmatpush1.msra.mxu0 %v169
    %661 = vmatprep.subr.mxu0 0.0
    %662 = vmatpush1.msra.mxu0 %v170
    %663 = vmatprep.subr.mxu0 0.0
    %664 = vmatpush1.msra.mxu0 %v171
    %665 = vmatprep.subr.mxu0 0.0
    %666 = vmatpush1.msra.mxu0 %v172
    %667 = vmatprep.subr.mxu0 0.0
    %668 = vmatpush1.msra.mxu0 %v173
    %669 = vmatprep.subr.mxu0 0.0
    %670 = vmatpush1.msra.mxu0 %v174
    %671 = vmatprep.subr.mxu0 0.0
    %672 = vmatpush1.msra.mxu0 %v175
    %673 = vmatprep.subr.mxu0 0.0
    %674 = vmatpush1.msra.mxu0 %v176
    %675 = vmatprep.subr.mxu0 0.0
    %676 = vmatpush1.msra.mxu0 %v177
    %677 = vmatprep.subr.mxu0 0.0
    %678 = vmatpush1.msra.mxu0 %v178
    %679 = vmatprep.subr.mxu0 0.0
    %680 = vmatpush1.msra.mxu0 0.0
    %681 = vmatprep.subr.mxu0 0.0
    %682 = vmatpush1.msra.mxu0 0.0
    %683 = vmatprep.subr.mxu0 0.0
    %684 = vmatpush1.msra.mxu0 0.0
    %685 = vmatprep.subr.mxu0 0.0
    %686 = vmatpush1.msra.mxu0 0.0
    %687 = vmatprep.subr.mxu0 0.0
    %688 = vmatpush1.msra.mxu0 0.0
    %689 = vmatprep.subr.mxu0 0.0
    %690 = vmatpush1.msra.mxu0 0.0
    %691 = vmatprep.subr.mxu0 0.0
    %692 = vmatpush1.msra.mxu0 0.0
    %693 = vmatprep.subr.mxu0 0.0
    %694 = vmatpush1.msra.mxu0 0.0
    %695 = vmatprep.subr.mxu0 0.0
    %696 = vmatpush1.msra.mxu0 0.0
    %697 = vmatprep.subr.mxu0 0.0
    %698 = vmatpush1.msra.mxu0 0.0
    %699 = vmatprep.subr.mxu0 0.0
    %700 = vmatpush1.msra.mxu0 0.0
    %701 = vmatprep.subr.mxu0 0.0
    %702 = vmatpush1.msra.mxu0 0.0
    %703 = vmatprep.subr.mxu0 0.0
    %704 = vmatpush1.msra.mxu0 0.0
    %705 = vmatprep.subr.mxu0 0.0
    %706 = vmatpush1.msra.mxu0 0.0
    %707 = vmatprep.subr.mxu0 0.0
    %708 = vmatpush1.msra.mxu0 0.0
    %709 = vmatprep.subr.mxu0 0.0
    %710 = vmatpush1.msra.mxu0 0.0
    %711 = vmatprep.mubr.f32.mxu0 0.0
    %712 = vmatmul.mubr.f32.gmra.mrb[0].mxu0 %v646
    %v713 = vpop.f32.mrb[0].mxu0
    %v714 = vadd.f32 0.0, %v713
    %v715 = vpop.f32.mrb[0].mxu0
    %716 = vdwg.mxu0
    %v718 = vrot.slane %v714, 4
    %v720 = vadd.f32 %v155, %v718
    %v721 = vtanh.pop %v720
    %v722 = vmul.f32 %v721, %v182
    %v723 = vadd.f32 %v722, %v183
    %v725 = vrot.slane %v723, 4
    %727 = vrot.lane.b32.xlu0 %v725, 64
    %v728 = vpop.permute.xlu0 %727
    %v730 = vrot.slane %v728, 4
    %v732 = vmul.f32 %v723, %v730
    %v734 = vrot.slane %v732, 4
    %736 = vrot.lane.b32.xlu0 %v734, 32
    %v737 = vpop.permute.xlu0 %736
    %v739 = vrot.slane %v644, 4
    %v741 = vmul.f32 %v723, %v739
    %v743 = vrot.slane %v737, 4
    %v745 = vadd.f32 %v741, %v743
    %v746 = vtanh.pop %v745
    %v748 = vrot.slane %v746, 4
    %v750 = vmul.f32 %v728, %v748
    %751 = vmatprep.subr.mxu0 0.0
    %752 = vmatpush1.msra.mxu0 %v163
    %753 = vmatprep.subr.mxu0 0.0
    %754 = vmatpush1.msra.mxu0 %v164
    %755 = vmatprep.subr.mxu0 0.0
    %756 = vmatpush1.msra.mxu0 %v165
    %757 = vmatprep.subr.mxu0 0.0
    %758 = vmatpush1.msra.mxu0 %v166
    %759 = vmatprep.subr.mxu0 0.0
    %760 = vmatpush1.msra.mxu0 %v167
    %761 = vmatprep.subr.mxu0 0.0
    %762 = vmatpush1.msra.mxu0 %v168
    %763 = vmatprep.subr.mxu0 0.0
    %764 = vmatpush1.msra.mxu0 %v169
    %765 = vmatprep.subr.mxu0 0.0
    %766 = vmatpush1.msra.mxu0 %v170
    %767 = vmatprep.subr.mxu0 0.0
    %768 = vmatpush1.msra.mxu0 %v171
    %769 = vmatprep.subr.mxu0 0.0
    %770 = vmatpush1.msra.mxu0 %v172
    %771 = vmatprep.subr.mxu0 0.0
    %772 = vmatpush1.msra.mxu0 %v173
    %773 = vmatprep.subr.mxu0 0.0
    %774 = vmatpush1.msra.mxu0 %v174
    %775 = vmatprep.subr.mxu0 0.0
    %776 = vmatpush1.msra.mxu0 %v175
    %777 = vmatprep.subr.mxu0 0.0
    %778 = vmatpush1.msra.mxu0 %v176
    %779 = vmatprep.subr.mxu0 0.0
    %780 = vmatpush1.msra.mxu0 %v177
    %781 = vmatprep.subr.mxu0 0.0
    %782 = vmatpush1.msra.mxu0 %v178
    %783 = vmatprep.subr.mxu0 0.0
    %784 = vmatpush1.msra.mxu0 0.0
    %785 = vmatprep.subr.mxu0 0.0
    %786 = vmatpush1.msra.mxu0 0.0
    %787 = vmatprep.subr.mxu0 0.0
    %788 = vmatpush1.msra.mxu0 0.0
    %789 = vmatprep.subr.mxu0 0.0
    %790 = vmatpush1.msra.mxu0 0.0
    %791 = vmatprep.subr.mxu0 0.0
    %792 = vmatpush1.msra.mxu0 0.0
    %793 = vmatprep.subr.mxu0 0.0
    %794 = vmatpush1.msra.mxu0 0.0
    %795 = vmatprep.subr.mxu0 0.0
    %796 = vmatpush1.msra.mxu0 0.0
    %797 = vmatprep.subr.mxu0 0.0
    %798 = vmatpush1.msra.mxu0 0.0
    %799 = vmatprep.subr.mxu0 0.0
    %800 = vmatpush1.msra.mxu0 0.0
    %801 = vmatprep.subr.mxu0 0.0
    %802 = vmatpush1.msra.mxu0 0.0
    %803 = vmatprep.subr.mxu0 0.0
    %804 = vmatpush1.msra.mxu0 0.0
    %805 = vmatprep.subr.mxu0 0.0
    %806 = vmatpush1.msra.mxu0 0.0
    %807 = vmatprep.subr.mxu0 0.0
    %808 = vmatpush1.msra.mxu0 0.0
    %809 = vmatprep.subr.mxu0 0.0
    %810 = vmatpush1.msra.mxu0 0.0
    %811 = vmatprep.subr.mxu0 0.0
    %812 = vmatpush1.msra.mxu0 0.0
    %813 = vmatprep.subr.mxu0 0.0
    %814 = vmatpush1.msra.mxu0 0.0
    %815 = vmatprep.mubr.f32.mxu0 0.0
    %816 = vmatmul.mubr.f32.gmra.mrb[0].mxu0 %v750
    %v817 = vpop.f32.mrb[0].mxu0
    %v818 = vadd.f32 0.0, %v817
    %v819 = vpop.f32.mrb[0].mxu0
    %820 = vdwg.mxu0
    %v821 = vadd.f32 %v160, %v818
    %v822 = vtanh.pop %v821
    %v823 = vmul.f32 %v822, %v182
    %v824 = vadd.f32 %v823, %v183
    %825 = vrot.lane.b32.xlu0 %v824, 64
    %v826 = vpop.permute.xlu0 %825
    %v827 = vmul.f32 %v824, %v826
    %828 = vrot.lane.b32.xlu0 %v827, 32
    %v829 = vpop.permute.xlu0 %828
    %v831 = vrot.slane %v745, 4
    %v833 = vmul.f32 %v824, %v831
    %v834 = vadd.f32 %v833, %v829
    %v835 = vtanh.pop %v834
    %v836 = vmul.f32 %v826, %v835
    %837 = vmatprep.subr.mxu0 0.0
    %838 = vmatpush1.msra.mxu0 %v163
    %839 = vmatprep.subr.mxu0 0.0
    %840 = vmatpush1.msra.mxu0 %v164
    %841 = vmatprep.subr.mxu0 0.0
    %842 = vmatpush1.msra.mxu0 %v165
    %843 = vmatprep.subr.mxu0 0.0
    %844 = vmatpush1.msra.mxu0 %v166
    %845 = vmatprep.subr.mxu0 0.0
    %846 = vmatpush1.msra.mxu0 %v167
    %847 = vmatprep.subr.mxu0 0.0
    %848 = vmatpush1.msra.mxu0 %v168
    %849 = vmatprep.subr.mxu0 0.0
    %850 = vmatpush1.msra.mxu0 %v169
    %851 = vmatprep.subr.mxu0 0.0
    %852 = vmatpush1.msra.mxu0 %v170
    %853 = vmatprep.subr.mxu0 0.0
    %854 = vmatpush1.msra.mxu0 %v171
    %855 = vmatprep.subr.mxu0 0.0
    %856 = vmatpush1.msra.mxu0 %v172
    %857 = vmatprep.subr.mxu0 0.0
    %858 = vmatpush1.msra.mxu0 %v173
    %859 = vmatprep.subr.mxu0 0.0
    %860 = vmatpush1.msra.mxu0 %v174
    %861 = vmatprep.subr.mxu0 0.0
    %862 = vmatpush1.msra.mxu0 %v175
    %863 = vmatprep.subr.mxu0 0.0
    %864 = vmatpush1.msra.mxu0 %v176
    %865 = vmatprep.subr.mxu0 0.0
    %866 = vmatpush1.msra.mxu0 %v177
    %867 = vmatprep.subr.mxu0 0.0
    %868 = vmatpush1.msra.mxu0 %v178
    %869 = vmatprep.subr.mxu0 0.0
    %870 = vmatpush1.msra.mxu0 0.0
    %871 = vmatprep.subr.mxu0 0.0
    %872 = vmatpush1.msra.mxu0 0.0
    %873 = vmatprep.subr.mxu0 0.0
    %874 = vmatpush1.msra.mxu0 0.0
    %875 = vmatprep.subr.mxu0 0.0
    %876 = vmatpush1.msra.mxu0 0.0
    %877 = vmatprep.subr.mxu0 0.0
    %878 = vmatpush1.msra.mxu0 0.0
    %879 = vmatprep.subr.mxu0 0.0
    %880 = vmatpush1.msra.mxu0 0.0
    %881 = vmatprep.subr.mxu0 0.0
    %882 = vmatpush1.msra.mxu0 0.0
    %883 = vmatprep.subr.mxu0 0.0
    %884 = vmatpush1.msra.mxu0 0.0
    %885 = vmatprep.subr.mxu0 0.0
    %886 = vmatpush1.msra.mxu0 0.0
    %887 = vmatprep.subr.mxu0 0.0
    %888 = vmatpush1.msra.mxu0 0.0
    %889 = vmatprep.subr.mxu0 0.0
    %890 = vmatpush1.msra.mxu0 0.0
    %891 = vmatprep.subr.mxu0 0.0
    %892 = vmatpush1.msra.mxu0 0.0
    %893 = vmatprep.subr.mxu0 0.0
    %894 = vmatpush1.msra.mxu0 0.0
    %895 = vmatprep.subr.mxu0 0.0
    %896 = vmatpush1.msra.mxu0 0.0
    %897 = vmatprep.subr.mxu0 0.0
    %898 = vmatpush1.msra.mxu0 0.0
    %899 = vmatprep.subr.mxu0 0.0
    %900 = vmatpush1.msra.mxu0 0.0
    %901 = vmatprep.mubr.f32.mxu0 0.0
    %902 = vmatmul.mubr.f32.gmra.mrb[0].mxu0 %v836
    %v903 = vpop.f32.mrb[0].mxu0
    %v904 = vadd.f32 0.0, %v903
    %v905 = vpop.f32.mrb[0].mxu0
    %906 = vdwg.mxu0
    %v908 = vrot.slane %v904, 4
    %v910 = vadd.f32 %v160, %v908
    %v911 = vtanh.pop %v910
    %v912 = vmul.f32 %v911, %v182
    %v913 = vadd.f32 %v912, %v183
    %v915 = vrot.slane %v913, 4
    %917 = vrot.lane.b32.xlu0 %v915, 64
    %v918 = vpop.permute.xlu0 %917
    %v920 = vrot.slane %v918, 4
    %v922 = vmul.f32 %v913, %v920
    %v924 = vrot.slane %v922, 4
    %926 = vrot.lane.b32.xlu0 %v924, 32
    %v927 = vpop.permute.xlu0 %926
    %v929 = vrot.slane %v834, 4
    %v931 = vmul.f32 %v913, %v929
    %v933 = vrot.slane %v927, 4
    %v935 = vadd.f32 %v931, %v933
    %v936 = vtanh.pop %v935
    %v938 = vrot.slane %v936, 4
    %v940 = vmul.f32 %v918, %v938
    %v941 = vld [vmem:[#allocation5] sm:$0xff]
    %v942 = vld [vmem:[#allocation5 + $0x8] sm:$0xff]
    %v943 = vld [vmem:[#allocation5 + $0x10] sm:$0xff]
    %v944 = vld [vmem:[#allocation5 + $0x18] sm:$0xff]
    %v945 = vld [vmem:[#allocation5 + $0x20] sm:$0xff]
    %v946 = vld [vmem:[#allocation5 + $0x28] sm:$0xff]
    %v947 = vld [vmem:[#allocation5 + $0x30] sm:$0xff]
    %v948 = vld [vmem:[#allocation5 + $0x38] sm:$0xff]
    %v949 = vld [vmem:[#allocation5 + $0x40] sm:$0xff]
    %v950 = vld [vmem:[#allocation5 + $0x48] sm:$0xff]
    %v951 = vld [vmem:[#allocation5 + $0x50] sm:$0xff]
    %v952 = vld [vmem:[#allocation5 + $0x58] sm:$0xff]
    %v953 = vld [vmem:[#allocation5 + $0x60] sm:$0xff]
    %v954 = vld [vmem:[#allocation5 + $0x68] sm:$0xff]
    %v955 = vld [vmem:[#allocation5 + $0x70] sm:$0xff]
    %v956 = vld [vmem:[#allocation5 + $0x78] sm:$0xff]
    %v957 = vld [vmem:[%s5] sm:$0x1]
    %v959 = vlaneseq
    %v960 = vshrl.u32 %v959, 7
    %v961 = vsub.s32 0, %v960
    %v962 = vrot.slane %v957, %v961
    %964 = vmatprep.subr.mxu0 0.0
    %965 = vmatpush1.msra.mxu0 %v941
    %966 = vmatprep.subr.mxu0 0.0
    %967 = vmatpush1.msra.mxu0 %v942
    %968 = vmatprep.subr.mxu0 0.0
    %969 = vmatpush1.msra.mxu0 %v943
    %970 = vmatprep.subr.mxu0 0.0
    %971 = vmatpush1.msra.mxu0 %v944
    %972 = vmatprep.subr.mxu0 0.0
    %973 = vmatpush1.msra.mxu0 %v945
    %974 = vmatprep.subr.mxu0 0.0
    %975 = vmatpush1.msra.mxu0 %v946
    %976 = vmatprep.subr.mxu0 0.0
    %977 = vmatpush1.msra.mxu0 %v947
    %978 = vmatprep.subr.mxu0 0.0
    %979 = vmatpush1.msra.mxu0 %v948
    %980 = vmatprep.subr.mxu0 0.0
    %981 = vmatpush1.msra.mxu0 %v949
    %982 = vmatprep.subr.mxu0 0.0
    %983 = vmatpush1.msra.mxu0 %v950
    %984 = vmatprep.subr.mxu0 0.0
    %985 = vmatpush1.msra.mxu0 %v951
    %986 = vmatprep.subr.mxu0 0.0
    %987 = vmatpush1.msra.mxu0 %v952
    %988 = vmatprep.subr.mxu0 0.0
    %989 = vmatpush1.msra.mxu0 %v953
    %990 = vmatprep.subr.mxu0 0.0
    %991 = vmatpush1.msra.mxu0 %v954
    %992 = vmatprep.subr.mxu0 0.0
    %993 = vmatpush1.msra.mxu0 %v955
    %994 = vmatprep.subr.mxu0 0.0
    %995 = vmatpush1.msra.mxu0 %v956
    %996 = vmatprep.subr.mxu0 0.0
    %997 = vmatpush1.msra.mxu0 0.0
    %998 = vmatprep.subr.mxu0 0.0
    %999 = vmatpush1.msra.mxu0 0.0
    %1000 = vmatprep.subr.mxu0 0.0
    %1001 = vmatpush1.msra.mxu0 0.0
    %1002 = vmatprep.subr.mxu0 0.0
    %1003 = vmatpush1.msra.mxu0 0.0
    %1004 = vmatprep.subr.mxu0 0.0
    %1005 = vmatpush1.msra.mxu0 0.0
    %1006 = vmatprep.subr.mxu0 0.0
    %1007 = vmatpush1.msra.mxu0 0.0
    %1008 = vmatprep.subr.mxu0 0.0
    %1009 = vmatpush1.msra.mxu0 0.0
    %1010 = vmatprep.subr.mxu0 0.0
    %1011 = vmatpush1.msra.mxu0 0.0
    %1012 = vmatprep.subr.mxu0 0.0
    %1013 = vmatpush1.msra.mxu0 0.0
    %1014 = vmatprep.subr.mxu0 0.0
    %1015 = vmatpush1.msra.mxu0 0.0
    %1016 = vmatprep.subr.mxu0 0.0
    %1017 = vmatpush1.msra.mxu0 0.0
    %1018 = vmatprep.subr.mxu0 0.0
    %1019 = vmatpush1.msra.mxu0 0.0
    %1020 = vmatprep.subr.mxu0 0.0
    %1021 = vmatpush1.msra.mxu0 0.0
    %1022 = vmatprep.subr.mxu0 0.0
    %1023 = vmatpush1.msra.mxu0 0.0
    %1024 = vmatprep.subr.mxu0 0.0
    %1025 = vmatpush1.msra.mxu0 0.0
    %1026 = vmatprep.subr.mxu0 0.0
    %1027 = vmatpush1.msra.mxu0 0.0
    %1028 = vmatprep.mubr.f32.mxu0 0.0
    %1029 = vmatmul.mubr.f32.gmra.mrb[0].mxu0 %v940
    %v1030 = vpop.f32.mrb[0].mxu0
    %v1031 = vadd.f32 %v962, %v1030
    %v1032 = vpop.f32.mrb[0].mxu0
    %1033 = vdwg.mxu0
    %1034 = vst [vmem:[#allocation7] sm:$0xf] %v1031
    // Predicated region
    $region34: #{lstm_model_forward.1} parent=1 // pred_check
      _
    $region35: #{lstm_model_forward.1} parent=1 // pred_check_branch
      %1036 = sbr.rel (0) target = $region37
    $region36: #{lstm_model_forward.1} parent=1 // pred_region
      %s1038 = ssub.s32 64, 64
      %1039 = vsyncadd [#allocation4], %s1038
      %s1041 = sshll.u32 [#allocation7], 4
      %s1042 = int_to_ptr.vmem [resolvable:$true] %s1041
      %1044 = dma.vmem_to_hbm [thread:$0]  %s1042, 64, %s6, [#allocation4]
    $region37: #{lstm_model_forward.1} parent=1 // pred_fallthru
      _
    // Predicated region
    $region38: #{lstm_model_forward.1} parent=1 // pred_check
      _
    $region39: #{lstm_model_forward.1} parent=1 // pred_check_branch
      %1046 = sbr.rel (0) target = $region41
    $region40: #{lstm_model_forward.1} parent=1 // pred_region
      %1047 = dma.done [#allocation4], 64
    $region41: #{lstm_model_forward.1} parent=1 // pred_fallthru
      _
    %1048 = vsyncpa [#allocation3], 1
    %1049 = vsyncpa [#allocation6], 1
    %1050 = vsyncpa [#allocation4], 1

</llo_original>
